<compile_context>
chip_gen: v5e
topology: v5e:2x2
jax: 0.10.0
libtpu: 0.0.40
codegen_flags: <defaults>
</compile_context>

<pallas_src>
import functools

import jax
import jax.numpy as jnp
from jax.experimental import pallas as pl
from jax.experimental.pallas import tpu as pltpu


def _round_up(n, m):
    return ((n + m - 1) // m) * m


def _sigmoid(h):
    # Single EUP push (tanh) + 2 cheap VPU ops; avoids exp overflow and the
    # approximate-reciprocal path entirely.
    return 0.5 * jnp.tanh(0.5 * h) + 0.5


def _mlp_kernel(x_ref, w1_ref, b1_ref, w2_ref, b2_ref, w3_ref, b3_ref, o_ref):
    # All-f32 path: at K = 16/32 the MXU is underfed regardless of operand
    # dtype, so bf16 packing would only add VPU work. Accumulate in f32.
    x = x_ref[...]

    h1 = jnp.dot(x, w1_ref[...], preferred_element_type=jnp.float32) + b1_ref[...]
    h1 = _sigmoid(h1)

    h2 = jnp.dot(h1, w2_ref[...], preferred_element_type=jnp.float32) + b2_ref[...]
    h2 = _sigmoid(h2)

    out = jnp.dot(h2, w3_ref[...], preferred_element_type=jnp.float32) + b3_ref[...]
    o_ref[...] = out.astype(o_ref.dtype)


@functools.partial(jax.jit, static_argnames=("block_batch",))
def fully_connected_nn(x, w1, b1, w2, b2, w3, b3, *, block_batch=None):
    """Fused 3-layer MLP forward pass as a single Pallas kernel.

    x:  [B, input_dim]
    w1: [input_dim, hidden], b1: [1, hidden]
    w2: [hidden, hidden],    b2: [1, hidden]
    w3: [hidden, output],    b3: [1, output]
    """
    B, input_dim = x.shape
    hidden = w1.shape[1]
    output_dim = w3.shape[1]

    if block_batch is None:
        # Single grid step for small/medium B (no per-step overhead wasted on
        # single-TC v5e/v6e, and too little per-tile work to justify a cross-TC
        # split on v7x). For larger B, 256-row tiles keep the live [tile, 32]
        # f32 activations within the 64-vreg file while amortizing the
        # ~0.35 us/step pipeline cost.
        block_batch = min(256, _round_up(B, 8))

    grid = (pl.cdiv(B, block_batch),)

    # Weights/biases are tiny: keep the full tensors resident for every batch
    # tile (index_map always returns block (0, 0)).
    full = lambda i: (0, 0)
    batch_tile = lambda i: (i, 0)

    # NOTE: when B % block_batch != 0 the last tile reads padded/undefined
    # input rows. This is safe because rows are fully independent and the
    # output store for out-of-range rows is masked — do not add any
    # cross-row reduction inside the kernel without revisiting this.
    return pl.pallas_call(
        _mlp_kernel,
        out_shape=jax.ShapeDtypeStruct((B, output_dim), x.dtype),
        grid=grid,
        in_specs=[
            pl.BlockSpec((block_batch, input_dim), batch_tile),  # x
            pl.BlockSpec((input_dim, hidden), full),             # w1
            pl.BlockSpec((1, hidden), full),                     # b1
            pl.BlockSpec((hidden, hidden), full),                # w2
            pl.BlockSpec((1, hidden), full),                     # b2
            pl.BlockSpec((hidden, output_dim), full),            # w3
            pl.BlockSpec((1, output_dim), full),                 # b3
        ],
        out_specs=pl.BlockSpec((block_batch, output_dim), batch_tile),
        compiler_params=pltpu.CompilerParams(
            dimension_semantics=("parallel",),
        ),
    )(x, w1, b1, w2, b2, w3, b3)


def init_linear(key, fan_in, fan_out, dtype=jnp.float32):
    """PyTorch-style nn.Linear init: U(-1/sqrt(fan_in), 1/sqrt(fan_in)).

    Returns W with shape [fan_in, fan_out] (transposed vs. PyTorch) and b [1, fan_out].
    """
    kw, kb = jax.random.split(key)
    bound = 1.0 / jnp.sqrt(fan_in)
    w = jax.random.uniform(kw, (fan_in, fan_out), dtype, minval=-bound, maxval=bound)
    b = jax.random.uniform(kb, (1, fan_out), dtype, minval=-bound, maxval=bound)
    return w, b


if __name__ == "__main__":
    # Small shapes consistent with the module's forward; batch=256 now runs as
    # a single 256-row grid step (no forced 2-way split).
    batch = 256
    input_dim = 16
    hidden_dim = 32
    output_dim = 8

    key = jax.random.PRNGKey(0)
    kx, k1, k2, k3 = jax.random.split(key, 4)

    x = jax.random.normal(kx, (batch, input_dim), jnp.float32)
    w1, b1 = init_linear(k1, input_dim, hidden_dim)
    w2, b2 = init_linear(k2, hidden_dim, hidden_dim)
    w3, b3 = init_linear(k3, hidden_dim, output_dim)

    out = fully_connected_nn(x, w1, b1, w2, b2, w3, b3)
    out = jax.block_until_ready(out)

    # Pure-JAX f32 reference. Kernel is f32 end to end; the tanh-form sigmoid
    # differs from jax.nn.sigmoid only by rounding, so the tolerance is tight.
    h = jax.nn.sigmoid(x @ w1 + b1)
    h = jax.nn.sigmoid(h @ w2 + b2)
    ref = h @ w3 + b3
    assert out.shape == (batch, output_dim)
    err = float(jnp.max(jnp.abs(out - ref)))
    assert jnp.allclose(out, ref, atol=1e-5, rtol=1e-5), f"max abs err {err}"

    print("KERNEL_OK")
</pallas_src>

<mosaic_0001>
module attributes {stable_mosaic.version = 11 : i64} {
  func.func @_mlp_kernel(%arg0: i32, %arg1: memref<256x16xf32, #tpu.memory_space<vmem>>, %arg2: memref<16x32xf32, #tpu.memory_space<vmem>>, %arg3: memref<1x32xf32, #tpu.memory_space<vmem>>, %arg4: memref<32x32xf32, #tpu.memory_space<vmem>>, %arg5: memref<1x32xf32, #tpu.memory_space<vmem>>, %arg6: memref<32x8xf32, #tpu.memory_space<vmem>>, %arg7: memref<1x8xf32, #tpu.memory_space<vmem>>, %arg8: memref<256x8xf32, #tpu.memory_space<vmem>>) attributes {dimension_semantics = [#tpu.dimension_semantics<parallel>], iteration_bounds = array<i64: 1>, scalar_prefetch = 0 : i64, scratch_operands = 0 : i64, tpu.core_type = #tpu.core_type<tc>, window_params = [{transform_indices = @transform_0, window_bounds = array<i64: 256, 16>}, {pipeline_mode = #tpu.pipeline_mode<synchronous>, transform_indices = @transform_1, window_bounds = array<i64: 16, 32>}, {pipeline_mode = #tpu.pipeline_mode<synchronous>, transform_indices = @transform_2, window_bounds = array<i64: 1, 32>}, {pipeline_mode = #tpu.pipeline_mode<synchronous>, transform_indices = @transform_3, window_bounds = array<i64: 32, 32>}, {pipeline_mode = #tpu.pipeline_mode<synchronous>, transform_indices = @transform_4, window_bounds = array<i64: 1, 32>}, {pipeline_mode = #tpu.pipeline_mode<synchronous>, transform_indices = @transform_5, window_bounds = array<i64: 32, 8>}, {pipeline_mode = #tpu.pipeline_mode<synchronous>, transform_indices = @transform_6, window_bounds = array<i64: 1, 8>}, {transform_indices = @transform_7, window_bounds = array<i64: 256, 8>}]} {
    %c0 = arith.constant 0 : index
    %c0_0 = arith.constant 0 : index
    %0 = vector.load %arg1[%c0, %c0_0] : memref<256x16xf32, #tpu.memory_space<vmem>>, vector<256x16xf32>
    %c0_1 = arith.constant 0 : index
    %c0_2 = arith.constant 0 : index
    %1 = vector.load %arg2[%c0_1, %c0_2] : memref<16x32xf32, #tpu.memory_space<vmem>>, vector<16x32xf32>
    %cst = arith.constant dense<0.000000e+00> : vector<256x32xf32>
    %2 = tpu.matmul %0, %1, %cst {dimension_numbers = #tpu.dot_dimension_numbers<[1], [0], [0], [1], [0, 0, 1, 1], [], []>} : vector<256x16xf32>, vector<16x32xf32>, vector<256x32xf32> -> vector<256x32xf32>
    %c0_3 = arith.constant 0 : index
    %c0_4 = arith.constant 0 : index
    %3 = vector.load %arg3[%c0_3, %c0_4] : memref<1x32xf32, #tpu.memory_space<vmem>>, vector<1x32xf32>
    %4 = vector.broadcast %3 : vector<1x32xf32> to vector<256x32xf32>
    %5 = arith.addf %2, %4 : vector<256x32xf32>
    %cst_5 = arith.constant 5.000000e-01 : f32
    %6 = vector.broadcast %cst_5 : f32 to vector<256x32xf32>
    %7 = arith.mulf %6, %5 : vector<256x32xf32>
    %8 = math.tanh %7 : vector<256x32xf32>
    %cst_6 = arith.constant 5.000000e-01 : f32
    %9 = vector.broadcast %cst_6 : f32 to vector<256x32xf32>
    %10 = arith.mulf %9, %8 : vector<256x32xf32>
    %cst_7 = arith.constant 5.000000e-01 : f32
    %11 = vector.broadcast %cst_7 : f32 to vector<256x32xf32>
    %12 = arith.addf %10, %11 : vector<256x32xf32>
    %c0_8 = arith.constant 0 : index
    %c0_9 = arith.constant 0 : index
    %13 = vector.load %arg4[%c0_8, %c0_9] : memref<32x32xf32, #tpu.memory_space<vmem>>, vector<32x32xf32>
    %cst_10 = arith.constant dense<0.000000e+00> : vector<256x32xf32>
    %14 = tpu.matmul %12, %13, %cst_10 {dimension_numbers = #tpu.dot_dimension_numbers<[1], [0], [0], [1], [0, 0, 1, 1], [], []>} : vector<256x32xf32>, vector<32x32xf32>, vector<256x32xf32> -> vector<256x32xf32>
    %c0_11 = arith.constant 0 : index
    %c0_12 = arith.constant 0 : index
    %15 = vector.load %arg5[%c0_11, %c0_12] : memref<1x32xf32, #tpu.memory_space<vmem>>, vector<1x32xf32>
    %16 = vector.broadcast %15 : vector<1x32xf32> to vector<256x32xf32>
    %17 = arith.addf %14, %16 : vector<256x32xf32>
    %cst_13 = arith.constant 5.000000e-01 : f32
    %18 = vector.broadcast %cst_13 : f32 to vector<256x32xf32>
    %19 = arith.mulf %18, %17 : vector<256x32xf32>
    %20 = math.tanh %19 : vector<256x32xf32>
    %cst_14 = arith.constant 5.000000e-01 : f32
    %21 = vector.broadcast %cst_14 : f32 to vector<256x32xf32>
    %22 = arith.mulf %21, %20 : vector<256x32xf32>
    %cst_15 = arith.constant 5.000000e-01 : f32
    %23 = vector.broadcast %cst_15 : f32 to vector<256x32xf32>
    %24 = arith.addf %22, %23 : vector<256x32xf32>
    %c0_16 = arith.constant 0 : index
    %c0_17 = arith.constant 0 : index
    %25 = vector.load %arg6[%c0_16, %c0_17] : memref<32x8xf32, #tpu.memory_space<vmem>>, vector<32x8xf32>
    %cst_18 = arith.constant dense<0.000000e+00> : vector<256x8xf32>
    %26 = tpu.matmul %24, %25, %cst_18 {dimension_numbers = #tpu.dot_dimension_numbers<[1], [0], [0], [1], [0, 0, 1, 1], [], []>} : vector<256x32xf32>, vector<32x8xf32>, vector<256x8xf32> -> vector<256x8xf32>
    %c0_19 = arith.constant 0 : index
    %c0_20 = arith.constant 0 : index
    %27 = vector.load %arg7[%c0_19, %c0_20] : memref<1x8xf32, #tpu.memory_space<vmem>>, vector<1x8xf32>
    %28 = vector.broadcast %27 : vector<1x8xf32> to vector<256x8xf32>
    %29 = arith.addf %26, %28 : vector<256x8xf32>
    %c0_21 = arith.constant 0 : index
    %c0_22 = arith.constant 0 : index
    %30 = vector.load %arg8[%c0_21, %c0_22] : memref<256x8xf32, #tpu.memory_space<vmem>>, vector<256x8xf32>
    tpu.vector_store %arg8[%c0_21, %c0_22], %29 {strides = array<i32>} : memref<256x8xf32, #tpu.memory_space<vmem>>, vector<256x8xf32>,
    return
  }
  func.func @transform_0(%arg0: i32) -> (i32, i32) {
    %c0_i32 = arith.constant 0 : i32
    %c0_i32_0 = arith.constant 0 : i32
    return %arg0, %c0_i32 : i32, i32
  }
  func.func @transform_1(%arg0: i32) -> (i32, i32) {
    %c0_i32 = arith.constant 0 : i32
    %c0_i32_0 = arith.constant 0 : i32
    %c0_i32_1 = arith.constant 0 : i32
    return %c0_i32, %c0_i32_0 : i32, i32
  }
  func.func @transform_2(%arg0: i32) -> (i32, i32) {
    %c0_i32 = arith.constant 0 : i32
    %c0_i32_0 = arith.constant 0 : i32
    %c0_i32_1 = arith.constant 0 : i32
    return %c0_i32, %c0_i32_0 : i32, i32
  }
  func.func @transform_3(%arg0: i32) -> (i32, i32) {
    %c0_i32 = arith.constant 0 : i32
    %c0_i32_0 = arith.constant 0 : i32
    %c0_i32_1 = arith.constant 0 : i32
    return %c0_i32, %c0_i32_0 : i32, i32
  }
  func.func @transform_4(%arg0: i32) -> (i32, i32) {
    %c0_i32 = arith.constant 0 : i32
    %c0_i32_0 = arith.constant 0 : i32
    %c0_i32_1 = arith.constant 0 : i32
    return %c0_i32, %c0_i32_0 : i32, i32
  }
  func.func @transform_5(%arg0: i32) -> (i32, i32) {
    %c0_i32 = arith.constant 0 : i32
    %c0_i32_0 = arith.constant 0 : i32
    %c0_i32_1 = arith.constant 0 : i32
    return %c0_i32, %c0_i32_0 : i32, i32
  }
  func.func @transform_6(%arg0: i32) -> (i32, i32) {
    %c0_i32 = arith.constant 0 : i32
    %c0_i32_0 = arith.constant 0 : i32
    %c0_i32_1 = arith.constant 0 : i32
    return %c0_i32, %c0_i32_0 : i32, i32
  }
  func.func @transform_7(%arg0: i32) -> (i32, i32) {
    %c0_i32 = arith.constant 0 : i32
    %c0_i32_0 = arith.constant 0 : i32
    return %arg0, %c0_i32 : i32, i32
  }
}

</mosaic_0001>

<llo_original>
// kernel: fully_connected_nn.1
$region0: #{fully_connected_nn.1}
  #allocation0 [shape = 'u32[]', space=smem, size = 0x4, offset = 0x4, fixed_abs, tag = 'smem constant byte address 0x4 - core index']
  #allocation1 [shape = 'u32[72,128]{1,0:T(1,128)}', space=vmem, size = 0x9000, scoped, tag = 'internal scratch']
  %s0 = inlined_call_operand.vmem [shape: f32[256,16], index: 0, kind: input, shape index: {}]
  %s1 = inlined_call_operand.vmem [shape: f32[16,32], index: 1, kind: input, shape index: {}]
  %s2 = inlined_call_operand.vmem [shape: f32[1,32], index: 2, kind: input, shape index: {}]
  %s3 = inlined_call_operand.vmem [shape: f32[32,32], index: 3, kind: input, shape index: {}]
  %s4 = inlined_call_operand.vmem [shape: f32[1,32], index: 4, kind: input, shape index: {}]
  %s5 = inlined_call_operand.vmem [shape: f32[32,8], index: 5, kind: input, shape index: {}]
  %s6 = inlined_call_operand.vmem [shape: f32[1,8], index: 6, kind: input, shape index: {}]
  %s7 = inlined_call_operand.vmem [shape: f32[256,8], index: 7, kind: output, shape index: {}]
  %s8 = sld [smem:[#allocation0]]
  $region38: #{fully_connected_nn.1} parent=0
    _
  %s10 = ssub.s32 1, %s8
  %s11 = scalar_select 0, %s10, %s8
  // Predicated region
  $region2: #{fully_connected_nn.1} parent=0 // pred_check
    _
  $region3: #{fully_connected_nn.1} parent=0 // pred_check_branch
    %13 = sbr.rel (0) target = $region5
  $region4: #{fully_connected_nn.1} parent=0 // pred_region
    _
  $region5: #{fully_connected_nn.1} parent=0 // pred_fallthru
    _
  // Predicated region
  $region6: #{fully_connected_nn.1} parent=0 // pred_check
    _
  $region7: #{fully_connected_nn.1} parent=0 // pred_check_branch
    %15 = sbr.rel (0) target = $region9
  $region8: #{fully_connected_nn.1} parent=0 // pred_region
    _
  $region9: #{fully_connected_nn.1} parent=0 // pred_fallthru
    _
  // Predicated region
  $region10: #{fully_connected_nn.1} parent=0 // pred_check
    _
  $region11: #{fully_connected_nn.1} parent=0 // pred_check_branch
    %17 = sbr.rel (0) target = $region13
  $region12: #{fully_connected_nn.1} parent=0 // pred_region
    _
  $region13: #{fully_connected_nn.1} parent=0 // pred_fallthru
    _
  // Predicated region
  $region14: #{fully_connected_nn.1} parent=0 // pred_check
    _
  $region15: #{fully_connected_nn.1} parent=0 // pred_check_branch
    %19 = sbr.rel (0) target = $region17
  $region16: #{fully_connected_nn.1} parent=0 // pred_region
    _
  $region17: #{fully_connected_nn.1} parent=0 // pred_fallthru
    _
  // Predicated region
  $region18: #{fully_connected_nn.1} parent=0 // pred_check
    _
  $region19: #{fully_connected_nn.1} parent=0 // pred_check_branch
    %21 = sbr.rel (0) target = $region21
  $region20: #{fully_connected_nn.1} parent=0 // pred_region
    _
  $region21: #{fully_connected_nn.1} parent=0 // pred_fallthru
    _
  // Predicated region
  $region22: #{fully_connected_nn.1} parent=0 // pred_check
    _
  $region23: #{fully_connected_nn.1} parent=0 // pred_check_branch
    %23 = sbr.rel (0) target = $region25
  $region24: #{fully_connected_nn.1} parent=0 // pred_region
    _
  $region25: #{fully_connected_nn.1} parent=0 // pred_fallthru
    _
  // Predicated region
  $region26: #{fully_connected_nn.1} parent=0 // pred_check
    _
  $region27: #{fully_connected_nn.1} parent=0 // pred_check_branch
    %25 = sbr.rel (0) target = $region29
  $region28: #{fully_connected_nn.1} parent=0 // pred_region
    _
  $region29: #{fully_connected_nn.1} parent=0 // pred_fallthru
    _
  %v26 = vld [vmem:[%s0] sm:$0xff]
  %v27 = vld [vmem:[%s0 + $0x8] sm:$0xff]
  %v28 = vld [vmem:[%s0 + $0x10] sm:$0xff]
  %v29 = vld [vmem:[%s0 + $0x18] sm:$0xff]
  %v30 = vld [vmem:[%s0 + $0x20] sm:$0xff]
  %v31 = vld [vmem:[%s0 + $0x28] sm:$0xff]
  %v32 = vld [vmem:[%s0 + $0x30] sm:$0xff]
  %v33 = vld [vmem:[%s0 + $0x38] sm:$0xff]
  %v34 = vld [vmem:[%s0 + $0x40] sm:$0xff]
  %v35 = vld [vmem:[%s0 + $0x48] sm:$0xff]
  %v36 = vld [vmem:[%s0 + $0x50] sm:$0xff]
  %v37 = vld [vmem:[%s0 + $0x58] sm:$0xff]
  %v38 = vld [vmem:[%s0 + $0x60] sm:$0xff]
  %v39 = vld [vmem:[%s0 + $0x68] sm:$0xff]
  %v40 = vld [vmem:[%s0 + $0x70] sm:$0xff]
  %v41 = vld [vmem:[%s0 + $0x78] sm:$0xff]
  %v42 = vld [vmem:[%s0 + $0x80] sm:$0xff]
  %v43 = vld [vmem:[%s0 + $0x88] sm:$0xff]
  %v44 = vld [vmem:[%s0 + $0x90] sm:$0xff]
  %v45 = vld [vmem:[%s0 + $0x98] sm:$0xff]
  %v46 = vld [vmem:[%s0 + $0xa0] sm:$0xff]
  %v47 = vld [vmem:[%s0 + $0xa8] sm:$0xff]
  %v48 = vld [vmem:[%s0 + $0xb0] sm:$0xff]
  %v49 = vld [vmem:[%s0 + $0xb8] sm:$0xff]
  %v50 = vld [vmem:[%s0 + $0xc0] sm:$0xff]
  %v51 = vld [vmem:[%s0 + $0xc8] sm:$0xff]
  %v52 = vld [vmem:[%s0 + $0xd0] sm:$0xff]
  %v53 = vld [vmem:[%s0 + $0xd8] sm:$0xff]
  %v54 = vld [vmem:[%s0 + $0xe0] sm:$0xff]
  %v55 = vld [vmem:[%s0 + $0xe8] sm:$0xff]
  %v56 = vld [vmem:[%s0 + $0xf0] sm:$0xff]
  %v57 = vld [vmem:[%s0 + $0xf8] sm:$0xff]
  %v58 = vld [vmem:[%s1] sm:$0xff]
  %v59 = vld [vmem:[%s1 + $0x8] sm:$0xff]
  %v60 = vld [vmem:[%s2] sm:$0x1]
  %v62 = vperm.slane %v60, 0
  %vm64 = vcmask 130048
  %v66 = vsel %vm64, %v26, 0
  %v69 = vsel %vm64, %v27, 0
  %v72 = vsel %vm64, %v28, 0
  %v75 = vsel %vm64, %v29, 0
  %v78 = vsel %vm64, %v30, 0
  %v81 = vsel %vm64, %v31, 0
  %v84 = vsel %vm64, %v32, 0
  %v87 = vsel %vm64, %v33, 0
  %v90 = vsel %vm64, %v34, 0
  %v93 = vsel %vm64, %v35, 0
  %v96 = vsel %vm64, %v36, 0
  %v99 = vsel %vm64, %v37, 0
  %v102 = vsel %vm64, %v38, 0
  %v105 = vsel %vm64, %v39, 0
  %v108 = vsel %vm64, %v40, 0
  %v111 = vsel %vm64, %v41, 0
  %v114 = vsel %vm64, %v42, 0
  %v117 = vsel %vm64, %v43, 0
  %v120 = vsel %vm64, %v44, 0
  %v123 = vsel %vm64, %v45, 0
  %v126 = vsel %vm64, %v46, 0
  %v129 = vsel %vm64, %v47, 0
  %v132 = vsel %vm64, %v48, 0
  %v135 = vsel %vm64, %v49, 0
  %v138 = vsel %vm64, %v50, 0
  %v141 = vsel %vm64, %v51, 0
  %v144 = vsel %vm64, %v52, 0
  %v147 = vsel %vm64, %v53, 0
  %v150 = vsel %vm64, %v54, 0
  %v153 = vsel %vm64, %v55, 0
  %v156 = vsel %vm64, %v56, 0
  %v159 = vsel %vm64, %v57, 0
  %161 = vmatpush.msra.mxu0 0.0
  %162 = vmatpush.msra.mxu0 0.0
  %163 = vmatpush.msra.mxu0 0.0
  %164 = vmatpush.msra.mxu0 0.0
  %165 = vmatpush.msra.mxu0 0.0
  %166 = vmatpush.msra.mxu0 0.0
  %167 = vmatpush.msra.mxu0 0.0
  %168 = vmatpush.msra.mxu0 0.0
  %169 = vmatpush.msra.mxu0 0.0
  %170 = vmatpush.msra.mxu0 0.0
  %171 = vmatpush.msra.mxu0 0.0
  %172 = vmatpush.msra.mxu0 0.0
  %173 = vmatpush.msra.mxu0 0.0
  %174 = vmatpush.msra.mxu0 0.0
  %175 = vmatpush.msra.mxu0 %v59
  %176 = vmatpush.msra.mxu0 %v58
  %177 = vmatmul.f32.gmra.mxu0 %v66
  %v178 = vpop.f32.mrf.mxu0
  %v179 = vadd.f32 %v62, %v178
  %180 = vmatmul.f32.gmra.mxu0 %v69
  %v181 = vpop.f32.mrf.mxu0
  %v182 = vadd.f32 %v62, %v181
  %183 = vmatmul.f32.gmra.mxu0 %v72
  %v184 = vpop.f32.mrf.mxu0
  %v185 = vadd.f32 %v62, %v184
  %186 = vmatmul.f32.gmra.mxu0 %v75
  %v187 = vpop.f32.mrf.mxu0
  %v188 = vadd.f32 %v62, %v187
  %189 = vmatmul.f32.gmra.mxu0 %v78
  %v190 = vpop.f32.mrf.mxu0
  %v191 = vadd.f32 %v62, %v190
  %192 = vmatmul.f32.gmra.mxu0 %v81
  %v193 = vpop.f32.mrf.mxu0
  %v194 = vadd.f32 %v62, %v193
  %195 = vmatmul.f32.gmra.mxu0 %v84
  %v196 = vpop.f32.mrf.mxu0
  %v197 = vadd.f32 %v62, %v196
  %198 = vmatmul.f32.gmra.mxu0 %v87
  %v199 = vpop.f32.mrf.mxu0
  %v200 = vadd.f32 %v62, %v199
  %201 = vmatmul.f32.gmra.mxu0 %v90
  %v202 = vpop.f32.mrf.mxu0
  %v203 = vadd.f32 %v62, %v202
  %204 = vmatmul.f32.gmra.mxu0 %v93
  %v205 = vpop.f32.mrf.mxu0
  %v206 = vadd.f32 %v62, %v205
  %207 = vmatmul.f32.gmra.mxu0 %v96
  %v208 = vpop.f32.mrf.mxu0
  %v209 = vadd.f32 %v62, %v208
  %210 = vmatmul.f32.gmra.mxu0 %v99
  %v211 = vpop.f32.mrf.mxu0
  %v212 = vadd.f32 %v62, %v211
  %213 = vmatmul.f32.gmra.mxu0 %v102
  %v214 = vpop.f32.mrf.mxu0
  %v215 = vadd.f32 %v62, %v214
  %216 = vmatmul.f32.gmra.mxu0 %v105
  %v217 = vpop.f32.mrf.mxu0
  %v218 = vadd.f32 %v62, %v217
  %219 = vmatmul.f32.gmra.mxu0 %v108
  %v220 = vpop.f32.mrf.mxu0
  %v221 = vadd.f32 %v62, %v220
  %222 = vmatmul.f32.gmra.mxu0 %v111
  %v223 = vpop.f32.mrf.mxu0
  %v224 = vadd.f32 %v62, %v223
  %225 = vmatmul.f32.gmra.mxu0 %v114
  %v226 = vpop.f32.mrf.mxu0
  %v227 = vadd.f32 %v62, %v226
  %228 = vmatmul.f32.gmra.mxu0 %v117
  %v229 = vpop.f32.mrf.mxu0
  %v230 = vadd.f32 %v62, %v229
  %231 = vmatmul.f32.gmra.mxu0 %v120
  %v232 = vpop.f32.mrf.mxu0
  %v233 = vadd.f32 %v62, %v232
  %234 = vmatmul.f32.gmra.mxu0 %v123
  %v235 = vpop.f32.mrf.mxu0
  %v236 = vadd.f32 %v62, %v235
  %237 = vmatmul.f32.gmra.mxu0 %v126
  %v238 = vpop.f32.mrf.mxu0
  %v239 = vadd.f32 %v62, %v238
  %240 = vmatmul.f32.gmra.mxu0 %v129
  %v241 = vpop.f32.mrf.mxu0
  %v242 = vadd.f32 %v62, %v241
  %243 = vmatmul.f32.gmra.mxu0 %v132
  %v244 = vpop.f32.mrf.mxu0
  %v245 = vadd.f32 %v62, %v244
  %246 = vmatmul.f32.gmra.mxu0 %v135
  %v247 = vpop.f32.mrf.mxu0
  %v248 = vadd.f32 %v62, %v247
  %249 = vmatmul.f32.gmra.mxu0 %v138
  %v250 = vpop.f32.mrf.mxu0
  %v251 = vadd.f32 %v62, %v250
  %252 = vmatmul.f32.gmra.mxu0 %v141
  %v253 = vpop.f32.mrf.mxu0
  %v254 = vadd.f32 %v62, %v253
  %255 = vmatmul.f32.gmra.mxu0 %v144
  %v256 = vpop.f32.mrf.mxu0
  %v257 = vadd.f32 %v62, %v256
  %258 = vmatmul.f32.gmra.mxu0 %v147
  %v259 = vpop.f32.mrf.mxu0
  %v260 = vadd.f32 %v62, %v259
  %261 = vmatmul.f32.gmra.mxu0 %v150
  %v262 = vpop.f32.mrf.mxu0
  %v263 = vadd.f32 %v62, %v262
  %264 = vmatmul.f32.gmra.mxu0 %v153
  %v265 = vpop.f32.mrf.mxu0
  %v266 = vadd.f32 %v62, %v265
  %267 = vmatmul.f32.gmra.mxu0 %v156
  %v268 = vpop.f32.mrf.mxu0
  %v269 = vadd.f32 %v62, %v268
  %270 = vmatmul.f32.gmra.mxu0 %v159
  %v271 = vpop.f32.mrf.mxu0
  %v272 = vadd.f32 %v62, %v271
  %273 = vdwg.mxu0
  %v274 = vmul.f32 %v179, 0.5
  %v275 = vmul.f32 %v182, 0.5
  %v276 = vmul.f32 %v185, 0.5
  %v277 = vmul.f32 %v188, 0.5
  %v278 = vmul.f32 %v191, 0.5
  %v279 = vmul.f32 %v194, 0.5
  %v280 = vmul.f32 %v197, 0.5
  %v281 = vmul.f32 %v200, 0.5
  %v282 = vmul.f32 %v203, 0.5
  %v283 = vmul.f32 %v206, 0.5
  %v284 = vmul.f32 %v209, 0.5
  %v285 = vmul.f32 %v212, 0.5
  %v286 = vmul.f32 %v215, 0.5
  %v287 = vmul.f32 %v218, 0.5
  %v288 = vmul.f32 %v221, 0.5
  %v289 = vmul.f32 %v224, 0.5
  %v290 = vmul.f32 %v227, 0.5
  %v291 = vmul.f32 %v230, 0.5
  %v292 = vmul.f32 %v233, 0.5
  %v293 = vmul.f32 %v236, 0.5
  %v294 = vmul.f32 %v239, 0.5
  %v295 = vmul.f32 %v242, 0.5
  %v296 = vmul.f32 %v245, 0.5
  %v297 = vmul.f32 %v248, 0.5
  %v298 = vmul.f32 %v251, 0.5
  %v299 = vmul.f32 %v254, 0.5
  %v300 = vmul.f32 %v257, 0.5
  %v301 = vmul.f32 %v260, 0.5
  %v302 = vmul.f32 %v263, 0.5
  %v303 = vmul.f32 %v266, 0.5
  %v304 = vmul.f32 %v269, 0.5
  %v305 = vmul.f32 %v272, 0.5
  %v306 = vtanh.pop %v274
  %v307 = vtanh.pop %v275
  %v308 = vtanh.pop %v276
  %v309 = vtanh.pop %v277
  %v310 = vtanh.pop %v278
  %v311 = vtanh.pop %v279
  %v312 = vtanh.pop %v280
  %v313 = vtanh.pop %v281
  %v314 = vtanh.pop %v282
  %v315 = vtanh.pop %v283
  %v316 = vtanh.pop %v284
  %v317 = vtanh.pop %v285
  %v318 = vtanh.pop %v286
  %v319 = vtanh.pop %v287
  %v320 = vtanh.pop %v288
  %v321 = vtanh.pop %v289
  %v322 = vtanh.pop %v290
  %v323 = vtanh.pop %v291
  %v324 = vtanh.pop %v292
  %v325 = vtanh.pop %v293
  %v326 = vtanh.pop %v294
  %v327 = vtanh.pop %v295
  %v328 = vtanh.pop %v296
  %v329 = vtanh.pop %v297
  %v330 = vtanh.pop %v298
  %v331 = vtanh.pop %v299
  %v332 = vtanh.pop %v300
  %v333 = vtanh.pop %v301
  %v334 = vtanh.pop %v302
  %v335 = vtanh.pop %v303
  %v336 = vtanh.pop %v304
  %v337 = vtanh.pop %v305
  %v338 = vmul.f32 %v306, 0.5
  %v339 = vmul.f32 %v307, 0.5
  %v340 = vmul.f32 %v308, 0.5
  %v341 = vmul.f32 %v309, 0.5
  %v342 = vmul.f32 %v310, 0.5
  %v343 = vmul.f32 %v311, 0.5
  %v344 = vmul.f32 %v312, 0.5
  %v345 = vmul.f32 %v313, 0.5
  %v346 = vmul.f32 %v314, 0.5
  %v347 = vmul.f32 %v315, 0.5
  %v348 = vmul.f32 %v316, 0.5
  %v349 = vmul.f32 %v317, 0.5
  %v350 = vmul.f32 %v318, 0.5
  %v351 = vmul.f32 %v319, 0.5
  %v352 = vmul.f32 %v320, 0.5
  %v353 = vmul.f32 %v321, 0.5
  %v354 = vmul.f32 %v322, 0.5
  %v355 = vmul.f32 %v323, 0.5
  %v356 = vmul.f32 %v324, 0.5
  %v357 = vmul.f32 %v325, 0.5
  %v358 = vmul.f32 %v326, 0.5
  %v359 = vmul.f32 %v327, 0.5
  %v360 = vmul.f32 %v328, 0.5
  %v361 = vmul.f32 %v329, 0.5
  %v362 = vmul.f32 %v330, 0.5
  %v363 = vmul.f32 %v331, 0.5
  %v364 = vmul.f32 %v332, 0.5
  %v365 = vmul.f32 %v333, 0.5
  %v366 = vmul.f32 %v334, 0.5
  %v367 = vmul.f32 %v335, 0.5
  %v368 = vmul.f32 %v336, 0.5
  %v369 = vmul.f32 %v337, 0.5
  %v370 = vadd.f32 %v338, 0.5
  %v371 = vadd.f32 %v339, 0.5
  %v372 = vadd.f32 %v340, 0.5
  %v373 = vadd.f32 %v341, 0.5
  %v374 = vadd.f32 %v342, 0.5
  %v375 = vadd.f32 %v343, 0.5
  %v376 = vadd.f32 %v344, 0.5
  %v377 = vadd.f32 %v345, 0.5
  %v378 = vadd.f32 %v346, 0.5
  %v379 = vadd.f32 %v347, 0.5
  %v380 = vadd.f32 %v348, 0.5
  %v381 = vadd.f32 %v349, 0.5
  %v382 = vadd.f32 %v350, 0.5
  %v383 = vadd.f32 %v351, 0.5
  %v384 = vadd.f32 %v352, 0.5
  %v385 = vadd.f32 %v353, 0.5
  %v386 = vadd.f32 %v354, 0.5
  %v387 = vadd.f32 %v355, 0.5
  %v388 = vadd.f32 %v356, 0.5
  %v389 = vadd.f32 %v357, 0.5
  %v390 = vadd.f32 %v358, 0.5
  %v391 = vadd.f32 %v359, 0.5
  %v392 = vadd.f32 %v360, 0.5
  %v393 = vadd.f32 %v361, 0.5
  %v394 = vadd.f32 %v362, 0.5
  %v395 = vadd.f32 %v363, 0.5
  %v396 = vadd.f32 %v364, 0.5
  %v397 = vadd.f32 %v365, 0.5
  %v398 = vadd.f32 %v366, 0.5
  %v399 = vadd.f32 %v367, 0.5
  %v400 = vadd.f32 %v368, 0.5
  %v401 = vadd.f32 %v369, 0.5
  %v402 = vld [vmem:[%s3] sm:$0xff]
  %v403 = vld [vmem:[%s3 + $0x8] sm:$0xff]
  %v404 = vld [vmem:[%s3 + $0x10] sm:$0xff]
  %v405 = vld [vmem:[%s3 + $0x18] sm:$0xff]
  %v406 = vld [vmem:[%s4] sm:$0x1]
  %v408 = vperm.slane %v406, 0
  %vm410 = vcmask 261120
  %v412 = vsel %vm410, %v370, 0
  %v415 = vsel %vm410, %v371, 0
  %v418 = vsel %vm410, %v372, 0
  %v421 = vsel %vm410, %v373, 0
  %v424 = vsel %vm410, %v374, 0
  %v427 = vsel %vm410, %v375, 0
  %v430 = vsel %vm410, %v376, 0
  %v433 = vsel %vm410, %v377, 0
  %v436 = vsel %vm410, %v378, 0
  %v439 = vsel %vm410, %v379, 0
  %v442 = vsel %vm410, %v380, 0
  %v445 = vsel %vm410, %v381, 0
  %v448 = vsel %vm410, %v382, 0
  %v451 = vsel %vm410, %v383, 0
  %v454 = vsel %vm410, %v384, 0
  %v457 = vsel %vm410, %v385, 0
  %v460 = vsel %vm410, %v386, 0
  %v463 = vsel %vm410, %v387, 0
  %v466 = vsel %vm410, %v388, 0
  %v469 = vsel %vm410, %v389, 0
  %v472 = vsel %vm410, %v390, 0
  %v475 = vsel %vm410, %v391, 0
  %v478 = vsel %vm410, %v392, 0
  %v481 = vsel %vm410, %v393, 0
  %v484 = vsel %vm410, %v394, 0
  %v487 = vsel %vm410, %v395, 0
  %v490 = vsel %vm410, %v396, 0
  %v493 = vsel %vm410, %v397, 0
  %v496 = vsel %vm410, %v398, 0
  %v499 = vsel %vm410, %v399, 0
  %v502 = vsel %vm410, %v400, 0
  %v505 = vsel %vm410, %v401, 0
  %507 = vmatpush.msra.mxu0 0.0
  %508 = vmatpush.msra.mxu0 0.0
  %509 = vmatpush.msra.mxu0 0.0
  %510 = vmatpush.msra.mxu0 0.0
  %511 = vmatpush.msra.mxu0 0.0
  %512 = vmatpush.msra.mxu0 0.0
  %513 = vmatpush.msra.mxu0 0.0
  %514 = vmatpush.msra.mxu0 0.0
  %515 = vmatpush.msra.mxu0 0.0
  %516 = vmatpush.msra.mxu0 0.0
  %517 = vmatpush.msra.mxu0 0.0
  %518 = vmatpush.msra.mxu0 0.0
  %519 = vmatpush.msra.mxu0 %v405
  %520 = vmatpush.msra.mxu0 %v404
  %521 = vmatpush.msra.mxu0 %v403
  %522 = vmatpush.msra.mxu0 %v402
  %523 = vmatmul.f32.gmra.mxu0 %v412
  %v524 = vpop.f32.mrf.mxu0
  %v525 = vadd.f32 %v408, %v524
  %526 = vmatmul.f32.gmra.mxu0 %v415
  %v527 = vpop.f32.mrf.mxu0
  %v528 = vadd.f32 %v408, %v527
  %529 = vmatmul.f32.gmra.mxu0 %v418
  %v530 = vpop.f32.mrf.mxu0
  %v531 = vadd.f32 %v408, %v530
  %532 = vmatmul.f32.gmra.mxu0 %v421
  %v533 = vpop.f32.mrf.mxu0
  %v534 = vadd.f32 %v408, %v533
  %535 = vmatmul.f32.gmra.mxu0 %v424
  %v536 = vpop.f32.mrf.mxu0
  %v537 = vadd.f32 %v408, %v536
  %538 = vmatmul.f32.gmra.mxu0 %v427
  %v539 = vpop.f32.mrf.mxu0
  %v540 = vadd.f32 %v408, %v539
  %541 = vmatmul.f32.gmra.mxu0 %v430
  %v542 = vpop.f32.mrf.mxu0
  %v543 = vadd.f32 %v408, %v542
  %544 = vmatmul.f32.gmra.mxu0 %v433
  %v545 = vpop.f32.mrf.mxu0
  %v546 = vadd.f32 %v408, %v545
  %547 = vmatmul.f32.gmra.mxu0 %v436
  %v548 = vpop.f32.mrf.mxu0
  %v549 = vadd.f32 %v408, %v548
  %550 = vmatmul.f32.gmra.mxu0 %v439
  %v551 = vpop.f32.mrf.mxu0
  %v552 = vadd.f32 %v408, %v551
  %553 = vmatmul.f32.gmra.mxu0 %v442
  %v554 = vpop.f32.mrf.mxu0
  %v555 = vadd.f32 %v408, %v554
  %556 = vmatmul.f32.gmra.mxu0 %v445
  %v557 = vpop.f32.mrf.mxu0
  %v558 = vadd.f32 %v408, %v557
  %559 = vmatmul.f32.gmra.mxu0 %v448
  %v560 = vpop.f32.mrf.mxu0
  %v561 = vadd.f32 %v408, %v560
  %562 = vmatmul.f32.gmra.mxu0 %v451
  %v563 = vpop.f32.mrf.mxu0
  %v564 = vadd.f32 %v408, %v563
  %565 = vmatmul.f32.gmra.mxu0 %v454
  %v566 = vpop.f32.mrf.mxu0
  %v567 = vadd.f32 %v408, %v566
  %568 = vmatmul.f32.gmra.mxu0 %v457
  %v569 = vpop.f32.mrf.mxu0
  %v570 = vadd.f32 %v408, %v569
  %571 = vmatmul.f32.gmra.mxu0 %v460
  %v572 = vpop.f32.mrf.mxu0
  %v573 = vadd.f32 %v408, %v572
  %574 = vmatmul.f32.gmra.mxu0 %v463
  %v575 = vpop.f32.mrf.mxu0
  %v576 = vadd.f32 %v408, %v575
  %577 = vmatmul.f32.gmra.mxu0 %v466
  %v578 = vpop.f32.mrf.mxu0
  %v579 = vadd.f32 %v408, %v578
  %580 = vmatmul.f32.gmra.mxu0 %v469
  %v581 = vpop.f32.mrf.mxu0
  %v582 = vadd.f32 %v408, %v581
  %583 = vmatmul.f32.gmra.mxu0 %v472
  %v584 = vpop.f32.mrf.mxu0
  %v585 = vadd.f32 %v408, %v584
  %586 = vmatmul.f32.gmra.mxu0 %v475
  %v587 = vpop.f32.mrf.mxu0
  %v588 = vadd.f32 %v408, %v587
  %589 = vmatmul.f32.gmra.mxu0 %v478
  %v590 = vpop.f32.mrf.mxu0
  %v591 = vadd.f32 %v408, %v590
  %592 = vmatmul.f32.gmra.mxu0 %v481
  %v593 = vpop.f32.mrf.mxu0
  %v594 = vadd.f32 %v408, %v593
  %595 = vmatmul.f32.gmra.mxu0 %v484
  %v596 = vpop.f32.mrf.mxu0
  %v597 = vadd.f32 %v408, %v596
  %598 = vmatmul.f32.gmra.mxu0 %v487
  %v599 = vpop.f32.mrf.mxu0
  %v600 = vadd.f32 %v408, %v599
  %601 = vmatmul.f32.gmra.mxu0 %v490
  %v602 = vpop.f32.mrf.mxu0
  %v603 = vadd.f32 %v408, %v602
  %604 = vmatmul.f32.gmra.mxu0 %v493
  %v605 = vpop.f32.mrf.mxu0
  %v606 = vadd.f32 %v408, %v605
  %607 = vmatmul.f32.gmra.mxu0 %v496
  %v608 = vpop.f32.mrf.mxu0
  %v609 = vadd.f32 %v408, %v608
  %610 = vmatmul.f32.gmra.mxu0 %v499
  %v611 = vpop.f32.mrf.mxu0
  %v612 = vadd.f32 %v408, %v611
  %613 = vmatmul.f32.gmra.mxu0 %v502
  %v614 = vpop.f32.mrf.mxu0
  %v615 = vadd.f32 %v408, %v614
  %616 = vmatmul.f32.gmra.mxu0 %v505
  %v617 = vpop.f32.mrf.mxu0
  %v618 = vadd.f32 %v408, %v617
  %619 = vdwg.mxu0
  %v620 = vmul.f32 %v525, 0.5
  %v621 = vmul.f32 %v528, 0.5
  %v622 = vmul.f32 %v531, 0.5
  %v623 = vmul.f32 %v534, 0.5
  %v624 = vmul.f32 %v537, 0.5
  %v625 = vmul.f32 %v540, 0.5
  %v626 = vmul.f32 %v543, 0.5
  %v627 = vmul.f32 %v546, 0.5
  %v628 = vmul.f32 %v549, 0.5
  %v629 = vmul.f32 %v552, 0.5
  %v630 = vmul.f32 %v555, 0.5
  %v631 = vmul.f32 %v558, 0.5
  %v632 = vmul.f32 %v561, 0.5
  %v633 = vmul.f32 %v564, 0.5
  %v634 = vmul.f32 %v567, 0.5
  %v635 = vmul.f32 %v570, 0.5
  %v636 = vmul.f32 %v573, 0.5
  %v637 = vmul.f32 %v576, 0.5
  %v638 = vmul.f32 %v579, 0.5
  %v639 = vmul.f32 %v582, 0.5
  %v640 = vmul.f32 %v585, 0.5
  %v641 = vmul.f32 %v588, 0.5
  %v642 = vmul.f32 %v591, 0.5
  %v643 = vmul.f32 %v594, 0.5
  %v644 = vmul.f32 %v597, 0.5
  %v645 = vmul.f32 %v600, 0.5
  %v646 = vmul.f32 %v603, 0.5
  %v647 = vmul.f32 %v606, 0.5
  %v648 = vmul.f32 %v609, 0.5
  %v649 = vmul.f32 %v612, 0.5
  %v650 = vmul.f32 %v615, 0.5
  %v651 = vmul.f32 %v618, 0.5
  %v652 = vtanh.pop %v620
  %v653 = vtanh.pop %v621
  %v654 = vtanh.pop %v622
  %v655 = vtanh.pop %v623
  %v656 = vtanh.pop %v624
  %v657 = vtanh.pop %v625
  %v658 = vtanh.pop %v626
  %v659 = vtanh.pop %v627
  %v660 = vtanh.pop %v628
  %v661 = vtanh.pop %v629
  %v662 = vtanh.pop %v630
  %v663 = vtanh.pop %v631
  %v664 = vtanh.pop %v632
  %v665 = vtanh.pop %v633
  %v666 = vtanh.pop %v634
  %v667 = vtanh.pop %v635
  %v668 = vtanh.pop %v636
  %v669 = vtanh.pop %v637
  %v670 = vtanh.pop %v638
  %v671 = vtanh.pop %v639
  %v672 = vtanh.pop %v640
  %v673 = vtanh.pop %v641
  %v674 = vtanh.pop %v642
  %v675 = vtanh.pop %v643
  %v676 = vtanh.pop %v644
  %v677 = vtanh.pop %v645
  %v678 = vtanh.pop %v646
  %v679 = vtanh.pop %v647
  %v680 = vtanh.pop %v648
  %v681 = vtanh.pop %v649
  %v682 = vtanh.pop %v650
  %v683 = vtanh.pop %v651
  %v684 = vmul.f32 %v652, 0.5
  %v685 = vmul.f32 %v653, 0.5
  %v686 = vmul.f32 %v654, 0.5
  %v687 = vmul.f32 %v655, 0.5
  %v688 = vmul.f32 %v656, 0.5
  %v689 = vmul.f32 %v657, 0.5
  %v690 = vmul.f32 %v658, 0.5
  %v691 = vmul.f32 %v659, 0.5
  %v692 = vmul.f32 %v660, 0.5
  %v693 = vmul.f32 %v661, 0.5
  %v694 = vmul.f32 %v662, 0.5
  %v695 = vmul.f32 %v663, 0.5
  %v696 = vmul.f32 %v664, 0.5
  %v697 = vmul.f32 %v665, 0.5
  %v698 = vmul.f32 %v666, 0.5
  %v699 = vmul.f32 %v667, 0.5
  %v700 = vmul.f32 %v668, 0.5
  %v701 = vmul.f32 %v669, 0.5
  %v702 = vmul.f32 %v670, 0.5
  %v703 = vmul.f32 %v671, 0.5
  %v704 = vmul.f32 %v672, 0.5
  %v705 = vmul.f32 %v673, 0.5
  %v706 = vmul.f32 %v674, 0.5
  %v707 = vmul.f32 %v675, 0.5
  %v708 = vmul.f32 %v676, 0.5
  %v709 = vmul.f32 %v677, 0.5
  %v710 = vmul.f32 %v678, 0.5
  %v711 = vmul.f32 %v679, 0.5
  %v712 = vmul.f32 %v680, 0.5
  %v713 = vmul.f32 %v681, 0.5
  %v714 = vmul.f32 %v682, 0.5
  %v715 = vmul.f32 %v683, 0.5
  %v716 = vadd.f32 %v684, 0.5
  %v717 = vadd.f32 %v685, 0.5
  %v718 = vadd.f32 %v686, 0.5
  %v719 = vadd.f32 %v687, 0.5
  %v720 = vadd.f32 %v688, 0.5
  %v721 = vadd.f32 %v689, 0.5
  %v722 = vadd.f32 %v690, 0.5
  %v723 = vadd.f32 %v691, 0.5
  %v724 = vadd.f32 %v692, 0.5
  %v725 = vadd.f32 %v693, 0.5
  %v726 = vadd.f32 %v694, 0.5
  %v727 = vadd.f32 %v695, 0.5
  %v728 = vadd.f32 %v696, 0.5
  %v729 = vadd.f32 %v697, 0.5
  %v730 = vadd.f32 %v698, 0.5
  %v731 = vadd.f32 %v699, 0.5
  %v732 = vadd.f32 %v700, 0.5
  %v733 = vadd.f32 %v701, 0.5
  %v734 = vadd.f32 %v702, 0.5
  %v735 = vadd.f32 %v703, 0.5
  %v736 = vadd.f32 %v704, 0.5
  %v737 = vadd.f32 %v705, 0.5
  %v738 = vadd.f32 %v706, 0.5
  %v739 = vadd.f32 %v707, 0.5
  %v740 = vadd.f32 %v708, 0.5
  %v741 = vadd.f32 %v709, 0.5
  %v742 = vadd.f32 %v710, 0.5
  %v743 = vadd.f32 %v711, 0.5
  %v744 = vadd.f32 %v712, 0.5
  %v745 = vadd.f32 %v713, 0.5
  %v746 = vadd.f32 %v714, 0.5
  %v747 = vadd.f32 %v715, 0.5
  %v748 = vld [vmem:[%s5] sm:$0xff]
  %v749 = vld [vmem:[%s5 + $0x8] sm:$0xff]
  %v750 = vld [vmem:[%s5 + $0x10] sm:$0xff]
  %v751 = vld [vmem:[%s5 + $0x18] sm:$0xff]
  %v752 = vld [vmem:[%s6] sm:$0x1]
  %v754 = vperm.slane %v752, 0
  %v757 = vsel %vm410, %v716, 0
  %v760 = vsel %vm410, %v717, 0
  %v763 = vsel %vm410, %v718, 0
  %v766 = vsel %vm410, %v719, 0
  %v769 = vsel %vm410, %v720, 0
  %v772 = vsel %vm410, %v721, 0
  %v775 = vsel %vm410, %v722, 0
  %v778 = vsel %vm410, %v723, 0
  %v781 = vsel %vm410, %v724, 0
  %v784 = vsel %vm410, %v725, 0
  %v787 = vsel %vm410, %v726, 0
  %v790 = vsel %vm410, %v727, 0
  %v793 = vsel %vm410, %v728, 0
  %v796 = vsel %vm410, %v729, 0
  %v799 = vsel %vm410, %v730, 0
  %v802 = vsel %vm410, %v731, 0
  %v805 = vsel %vm410, %v732, 0
  %v808 = vsel %vm410, %v733, 0
  %v811 = vsel %vm410, %v734, 0
  %v814 = vsel %vm410, %v735, 0
  %v817 = vsel %vm410, %v736, 0
  %v820 = vsel %vm410, %v737, 0
  %v823 = vsel %vm410, %v738, 0
  %v826 = vsel %vm410, %v739, 0
  %v829 = vsel %vm410, %v740, 0
  %v832 = vsel %vm410, %v741, 0
  %v835 = vsel %vm410, %v742, 0
  %v838 = vsel %vm410, %v743, 0
  %v841 = vsel %vm410, %v744, 0
  %v844 = vsel %vm410, %v745, 0
  %v847 = vsel %vm410, %v746, 0
  %v850 = vsel %vm410, %v747, 0
  %852 = vmatpush.msra.mxu0 0.0
  %853 = vmatpush.msra.mxu0 0.0
  %854 = vmatpush.msra.mxu0 0.0
  %855 = vmatpush.msra.mxu0 0.0
  %856 = vmatpush.msra.mxu0 0.0
  %857 = vmatpush.msra.mxu0 0.0
  %858 = vmatpush.msra.mxu0 0.0
  %859 = vmatpush.msra.mxu0 0.0
  %860 = vmatpush.msra.mxu0 0.0
  %861 = vmatpush.msra.mxu0 0.0
  %862 = vmatpush.msra.mxu0 0.0
  %863 = vmatpush.msra.mxu0 0.0
  %864 = vmatpush.msra.mxu0 %v751
  %865 = vmatpush.msra.mxu0 %v750
  %866 = vmatpush.msra.mxu0 %v749
  %867 = vmatpush.msra.mxu0 %v748
  %868 = vmatmul.f32.gmra.mxu0 %v757
  %v869 = vpop.f32.mrf.mxu0
  %v870 = vadd.f32 %v754, %v869
  %871 = vmatmul.f32.gmra.mxu0 %v760
  %v872 = vpop.f32.mrf.mxu0
  %v873 = vadd.f32 %v754, %v872
  %874 = vmatmul.f32.gmra.mxu0 %v763
  %v875 = vpop.f32.mrf.mxu0
  %v876 = vadd.f32 %v754, %v875
  %877 = vmatmul.f32.gmra.mxu0 %v766
  %v878 = vpop.f32.mrf.mxu0
  %v879 = vadd.f32 %v754, %v878
  %880 = vmatmul.f32.gmra.mxu0 %v769
  %v881 = vpop.f32.mrf.mxu0
  %v882 = vadd.f32 %v754, %v881
  %883 = vmatmul.f32.gmra.mxu0 %v772
  %v884 = vpop.f32.mrf.mxu0
  %v885 = vadd.f32 %v754, %v884
  %886 = vmatmul.f32.gmra.mxu0 %v775
  %v887 = vpop.f32.mrf.mxu0
  %v888 = vadd.f32 %v754, %v887
  %889 = vmatmul.f32.gmra.mxu0 %v778
  %v890 = vpop.f32.mrf.mxu0
  %v891 = vadd.f32 %v754, %v890
  %892 = vmatmul.f32.gmra.mxu0 %v781
  %v893 = vpop.f32.mrf.mxu0
  %v894 = vadd.f32 %v754, %v893
  %895 = vmatmul.f32.gmra.mxu0 %v784
  %v896 = vpop.f32.mrf.mxu0
  %v897 = vadd.f32 %v754, %v896
  %898 = vmatmul.f32.gmra.mxu0 %v787
  %v899 = vpop.f32.mrf.mxu0
  %v900 = vadd.f32 %v754, %v899
  %901 = vmatmul.f32.gmra.mxu0 %v790
  %v902 = vpop.f32.mrf.mxu0
  %v903 = vadd.f32 %v754, %v902
  %904 = vmatmul.f32.gmra.mxu0 %v793
  %v905 = vpop.f32.mrf.mxu0
  %v906 = vadd.f32 %v754, %v905
  %907 = vmatmul.f32.gmra.mxu0 %v796
  %v908 = vpop.f32.mrf.mxu0
  %v909 = vadd.f32 %v754, %v908
  %910 = vmatmul.f32.gmra.mxu0 %v799
  %v911 = vpop.f32.mrf.mxu0
  %v912 = vadd.f32 %v754, %v911
  %913 = vmatmul.f32.gmra.mxu0 %v802
  %v914 = vpop.f32.mrf.mxu0
  %v915 = vadd.f32 %v754, %v914
  %916 = vmatmul.f32.gmra.mxu0 %v805
  %v917 = vpop.f32.mrf.mxu0
  %v918 = vadd.f32 %v754, %v917
  %919 = vmatmul.f32.gmra.mxu0 %v808
  %v920 = vpop.f32.mrf.mxu0
  %v921 = vadd.f32 %v754, %v920
  %922 = vmatmul.f32.gmra.mxu0 %v811
  %v923 = vpop.f32.mrf.mxu0
  %v924 = vadd.f32 %v754, %v923
  %925 = vmatmul.f32.gmra.mxu0 %v814
  %v926 = vpop.f32.mrf.mxu0
  %v927 = vadd.f32 %v754, %v926
  %928 = vmatmul.f32.gmra.mxu0 %v817
  %v929 = vpop.f32.mrf.mxu0
  %v930 = vadd.f32 %v754, %v929
  %931 = vmatmul.f32.gmra.mxu0 %v820
  %v932 = vpop.f32.mrf.mxu0
  %v933 = vadd.f32 %v754, %v932
  %934 = vmatmul.f32.gmra.mxu0 %v823
  %v935 = vpop.f32.mrf.mxu0
  %v936 = vadd.f32 %v754, %v935
  %937 = vmatmul.f32.gmra.mxu0 %v826
  %v938 = vpop.f32.mrf.mxu0
  %v939 = vadd.f32 %v754, %v938
  %940 = vmatmul.f32.gmra.mxu0 %v829
  %v941 = vpop.f32.mrf.mxu0
  %v942 = vadd.f32 %v754, %v941
  %943 = vmatmul.f32.gmra.mxu0 %v832
  %v944 = vpop.f32.mrf.mxu0
  %v945 = vadd.f32 %v754, %v944
  %946 = vmatmul.f32.gmra.mxu0 %v835
  %v947 = vpop.f32.mrf.mxu0
  %v948 = vadd.f32 %v754, %v947
  %949 = vmatmul.f32.gmra.mxu0 %v838
  %v950 = vpop.f32.mrf.mxu0
  %v951 = vadd.f32 %v754, %v950
  %952 = vmatmul.f32.gmra.mxu0 %v841
  %v953 = vpop.f32.mrf.mxu0
  %v954 = vadd.f32 %v754, %v953
  %955 = vmatmul.f32.gmra.mxu0 %v844
  %v956 = vpop.f32.mrf.mxu0
  %v957 = vadd.f32 %v754, %v956
  %958 = vmatmul.f32.gmra.mxu0 %v847
  %v959 = vpop.f32.mrf.mxu0
  %v960 = vadd.f32 %v754, %v959
  %961 = vmatmul.f32.gmra.mxu0 %v850
  %v962 = vpop.f32.mrf.mxu0
  %v963 = vadd.f32 %v754, %v962
  %964 = vdwg.mxu0
  %vm965 = vcmask 64512
  %966 = vst.msk [vmem:[%s7] sm:$0xff] %vm965, %v870
  %967 = vst.msk [vmem:[%s7 + $0x8] sm:$0xff] %vm965, %v873
  %968 = vst.msk [vmem:[%s7 + $0x10] sm:$0xff] %vm965, %v876
  %969 = vst.msk [vmem:[%s7 + $0x18] sm:$0xff] %vm965, %v879
  %970 = vst.msk [vmem:[%s7 + $0x20] sm:$0xff] %vm965, %v882
  %971 = vst.msk [vmem:[%s7 + $0x28] sm:$0xff] %vm965, %v885
  %972 = vst.msk [vmem:[%s7 + $0x30] sm:$0xff] %vm965, %v888
  %973 = vst.msk [vmem:[%s7 + $0x38] sm:$0xff] %vm965, %v891
  %974 = vst.msk [vmem:[%s7 + $0x40] sm:$0xff] %vm965, %v894
  %975 = vst.msk [vmem:[%s7 + $0x48] sm:$0xff] %vm965, %v897
  %976 = vst.msk [vmem:[%s7 + $0x50] sm:$0xff] %vm965, %v900
  %977 = vst.msk [vmem:[%s7 + $0x58] sm:$0xff] %vm965, %v903
  %978 = vst.msk [vmem:[%s7 + $0x60] sm:$0xff] %vm965, %v906
  %979 = vst.msk [vmem:[%s7 + $0x68] sm:$0xff] %vm965, %v909
  %980 = vst.msk [vmem:[%s7 + $0x70] sm:$0xff] %vm965, %v912
  %981 = vst.msk [vmem:[%s7 + $0x78] sm:$0xff] %vm965, %v915
  %982 = vst.msk [vmem:[%s7 + $0x80] sm:$0xff] %vm965, %v918
  %983 = vst.msk [vmem:[%s7 + $0x88] sm:$0xff] %vm965, %v921
  %984 = vst.msk [vmem:[%s7 + $0x90] sm:$0xff] %vm965, %v924
  %985 = vst.msk [vmem:[%s7 + $0x98] sm:$0xff] %vm965, %v927
  %986 = vst.msk [vmem:[%s7 + $0xa0] sm:$0xff] %vm965, %v930
  %987 = vst.msk [vmem:[%s7 + $0xa8] sm:$0xff] %vm965, %v933
  %988 = vst.msk [vmem:[%s7 + $0xb0] sm:$0xff] %vm965, %v936
  %989 = vst.msk [vmem:[%s7 + $0xb8] sm:$0xff] %vm965, %v939
  %990 = vst.msk [vmem:[%s7 + $0xc0] sm:$0xff] %vm965, %v942
  %991 = vst.msk [vmem:[%s7 + $0xc8] sm:$0xff] %vm965, %v945
  %992 = vst.msk [vmem:[%s7 + $0xd0] sm:$0xff] %vm965, %v948
  %993 = vst.msk [vmem:[%s7 + $0xd8] sm:$0xff] %vm965, %v951
  %994 = vst.msk [vmem:[%s7 + $0xe0] sm:$0xff] %vm965, %v954
  %995 = vst.msk [vmem:[%s7 + $0xe8] sm:$0xff] %vm965, %v957
  %996 = vst.msk [vmem:[%s7 + $0xf0] sm:$0xff] %vm965, %v960
  %997 = vst.msk [vmem:[%s7 + $0xf8] sm:$0xff] %vm965, %v963
  // Predicated region
  $region30: #{fully_connected_nn.1} parent=0 // pred_check
    _
  $region31: #{fully_connected_nn.1} parent=0 // pred_check_branch
    %999 = sbr.rel (0) target = $region33
  $region32: #{fully_connected_nn.1} parent=0 // pred_region
    _
  $region33: #{fully_connected_nn.1} parent=0 // pred_fallthru
    _
  // Predicated region
  $region34: #{fully_connected_nn.1} parent=0 // pred_check
    _
  $region35: #{fully_connected_nn.1} parent=0 // pred_check_branch
    %1001 = sbr.rel (0) target = $region37
  $region36: #{fully_connected_nn.1} parent=0 // pred_region
    _
  $region37: #{fully_connected_nn.1} parent=0 // pred_fallthru
    _

</llo_original>
